<compile_context>
chip_gen: v7x
topology: tpu7x:2x2x1
jax: 0.10.0
libtpu: 0.0.40
codegen_flags: <defaults>
</compile_context>

<pallas_src>
import functools
import math

import jax
import jax.numpy as jnp
from jax import lax
from jax.experimental import pallas as pl
from jax.experimental.pallas import tpu as pltpu

_MAX_CORES = 2                       # leading "parallel" axis (megacore sharding)
_TILE_BYTES_CAP = 8 * 1024 * 1024    # hard per-input-tile ceiling


def _cdiv(a, b):
    return -(-a // b)


def _round_up(a, b):
    return _cdiv(a, b) * b


def _vmem_capacity_bytes():
    """Per-core VMEM capacity; conservative fallback if the query is unavailable."""
    try:
        cap = getattr(pltpu.get_tpu_info(), "vmem_capacity_bytes", None)
        if cap:
            return int(cap)
    except Exception:
        pass
    return 64 << 20                  # v7x per-core size — safe lower bound everywhere


def _tv_loss_kernel(a_ref, f_ref, out_ref, *, h, rows_total, needs_tail_mask):
    """Accumulate per-lane partial sums of squared vertical/horizontal diffs.

    a_ref, f_ref : (BR, W) tiles of the flattened (N*C*H, W) inputs; BR is a whole
                   number of image planes (BR = p_blk * H, BR % 8 == 0) except for
                   the single-tile case where BR == N*C*H.
    out_ref      : (2, W) per-core resident f32 accumulator;
                   row 0 = vertical term, row 1 = horizontal term.
    """
    s = pl.program_id(1)

    @pl.when(s == 0)
    def _init():
        out_ref[...] = jnp.zeros_like(out_ref)

    r = a_ref[...].astype(jnp.float32) - f_ref[...].astype(jnp.float32)
    br, w = r.shape

    # Previous row / previous column via XLU rotations (np.roll semantics:
    # rolled[i] = r[i-1], wrapping) — no misaligned slices, no relayout copies.
    dv = r - pltpu.roll(r, shift=1, axis=0)        # r[i, :] - r[i-1, :]
    dh = r - pltpu.roll(r, shift=1, axis=1)        # r[:, j] - r[:, j-1]

    ri = lax.broadcasted_iota(jnp.int32, (br, w), 0)
    ci = lax.broadcasted_iota(jnp.int32, (br, w), 1)

    # Vertical diffs are valid only where the previous row lies in the same image
    # plane, i.e. the row-in-block is NOT a multiple of h (blocks are plane
    # aligned). Avoid vector integer mod: power-of-two h -> bitwise AND;
    # otherwise an exact float trunc-divide (error margin >> 0.5/h for any
    # realistic tile height, so the comparison is exact).
    if h & (h - 1) == 0:
        valid_v = (ri & (h - 1)) != 0
    else:
        q = ((ri.astype(jnp.float32) + 0.5) * (1.0 / h)).astype(jnp.int32)
        valid_v = (q * h) != ri
    valid_h = ci > 0                               # mask the column-0 wrap

    if needs_tail_mask:
        # Rows past the real array in the ragged last block hold garbage from the
        # clipped DMA; surplus (duplicated) grid steps must contribute nothing.
        # Select (not multiply) so stale NaN/inf cannot leak into the sums.
        start = (pl.program_id(0) * pl.num_programs(1) + s) * br
        in_bounds = ri < (rows_total - start)
        valid_v = jnp.logical_and(valid_v, in_bounds)
        valid_h = jnp.logical_and(valid_h, in_bounds)

    dv = jnp.where(valid_v, dv, 0.0)
    dh = jnp.where(valid_h, dh, 0.0)

    # Per step: sublane-direction reductions only; the cross-lane reduction and
    # the division by the true element counts happen once in the wrapper.
    sv = jnp.sum(dv * dv, axis=0, keepdims=True)   # (1, W)
    sh = jnp.sum(dh * dh, axis=0, keepdims=True)   # (1, W)

    # Single full-block RMW of the resident accumulator (one vld + one vst per
    # step instead of two masked sub-block updates). Rows are stacked with a
    # select so we do not rely on sublane concatenation.
    row2 = lax.broadcasted_iota(jnp.int32, (2, w), 0)
    out_ref[...] += jnp.where(row2 == 0,
                              jnp.broadcast_to(sv, (2, w)),
                              jnp.broadcast_to(sh, (2, w)))


@functools.partial(jax.jit, static_argnames=("max_tile_bytes",))
def tv_loss(IA, IF, *, max_tile_bytes=None):
    """Pallas TV loss. IA, IF: (N, C, H, W). Returns a float32 scalar.

    Matches torch:
      r = IA - IF
      mean((r[:,:,1:,:]-r[:,:,:-1,:])**2) + mean((r[:,:,:,1:]-r[:,:,:,:-1])**2)
    (H == 1 or W == 1 degenerates to nan, same as torch's mean over empty.)
    """
    assert IA.shape == IF.shape and IA.ndim == 4
    n, c, h, w = IA.shape
    nc = n * c
    rows_total = nc * h
    itemsize = jnp.dtype(IA.dtype).itemsize
    lane_w = _round_up(w, 128)

    # Flattened 2-D views: bitcast reshapes under jit — no HBM copy, no padding.
    a2 = IA.reshape(rows_total, w)
    f2 = IF.reshape(rows_total, w)

    # --- generation-aware tile sizing --------------------------------------
    vmem_cap = _vmem_capacity_bytes()
    vmem_budget = (vmem_cap * 3) // 4              # ~25% headroom
    target_tile = min(_TILE_BYTES_CAP, vmem_budget // 8)
    if max_tile_bytes is not None:                 # test hook / manual override
        target_tile = min(target_tile, max_tile_bytes)

    m = 8 // math.gcd(h, 8)                        # plane granularity: (p_blk*h)%8==0
    plane_bytes = h * lane_w * itemsize            # padded VMEM bytes of one plane
    p_cap = max(m, (target_tile // max(plane_bytes, 1)) // m * m)
    # TODO(synk): a single plane larger than the per-tile budget (e.g. 4k x 4k f32)
    # still maps to one oversized block; intra-plane row tiling with a one-row halo
    # is not implemented here (hits v7x's 64 MiB VMEM first).

    if p_cap >= nc:
        # Whole problem fits in one resident tile: block == full flattened array
        # (full-dim blocks are exempt from the (8,128) divisibility rule).
        num_cores, steps, p_blk, br = 1, 1, nc, rows_total
    else:
        nblocks = _cdiv(nc, p_cap)
        num_cores = _MAX_CORES if nblocks >= _MAX_CORES else 1
        steps = _cdiv(nblocks, num_cores)
        # Rebalance the block size down to minimise tail over-read.
        p_blk = _round_up(_cdiv(nc, num_cores * steps), m)
        br = p_blk * h

    needs_tail = (num_cores * steps * p_blk) != nc
    last_block = max(_cdiv(nc, p_blk) - 1, 0)

    # Surplus grid steps (if any) re-read the last real block (clamped index) and
    # are masked in-kernel to contribute exactly zero — no zero-padded planes.
    def row_map(cc, s):
        return (jnp.minimum(cc * steps + s, last_block), 0)

    data_spec = pl.BlockSpec((br, w), row_map)

    block_bytes = _round_up(br, 8) * lane_w * itemsize
    working = 4 * block_bytes + (2 << 20)          # 2 inputs x double buffer + slack
    vmem_limit = int(min(max(working, 16 << 20), vmem_budget))

    kernel = functools.partial(
        _tv_loss_kernel, h=h, rows_total=rows_total, needs_tail_mask=needs_tail)

    sums = pl.pallas_call(
        kernel,
        out_shape=jax.ShapeDtypeStruct((num_cores, 2, w), jnp.float32),
        grid=(num_cores, steps),
        in_specs=[data_spec, data_spec],
        out_specs=pl.BlockSpec((None, 2, w), lambda cc, s: (cc, 0, 0)),
        compiler_params=pltpu.CompilerParams(
            dimension_semantics=("parallel", "arbitrary"),
            vmem_limit_bytes=vmem_limit,
        ),
        cost_estimate=pl.CostEstimate(
            flops=10 * rows_total * w,
            transcendentals=0,
            bytes_accessed=2 * rows_total * w * itemsize,
        ),
    )(a2, f2)

    # Cross-lane reduction + normalization by the true element counts (f32
    # accumulation is split across lanes / per-core blocks, which keeps drift low).
    sv = jnp.sum(sums[:, 0, :])
    sh = jnp.sum(sums[:, 1, :])
    tv1 = sv / jnp.float32(nc * (h - 1) * w)       # mean over N*C*(H-1)*W
    tv2 = sh / jnp.float32(nc * h * (w - 1))       # mean over N*C*H*(W-1)
    return tv1 + tv2


def tv_loss_ref(IA, IF):
    r = IA.astype(jnp.float32) - IF.astype(jnp.float32)
    tv1 = jnp.mean((r[:, :, 1:, :] - r[:, :, :-1, :]) ** 2)
    tv2 = jnp.mean((r[:, :, :, 1:] - r[:, :, :, :-1]) ** 2)
    return tv1 + tv2


if __name__ == "__main__":
    key = jax.random.PRNGKey(0)
    k1, k2, k3, k4 = jax.random.split(key, 4)

    # Primary shape implied by the module: single resident tile, one grid step.
    N, C, H, W = 2, 4, 16, 16
    IA = jax.random.normal(k1, (N, C, H, W), dtype=jnp.float32)
    IF = jax.random.normal(k2, (N, C, H, W), dtype=jnp.float32)
    out = jax.block_until_ready(tv_loss(IA, IF))
    ref = jax.block_until_ready(tv_loss_ref(IA, IF))
    assert jnp.allclose(out, ref, rtol=1e-5, atol=1e-6), (out, ref)

    # Multi-block / two-core / non-power-of-two-H path (tile size forced down).
    IA2 = jax.random.normal(k3, (2, 4, 12, 20), dtype=jnp.float32)
    IF2 = jax.random.normal(k4, (2, 4, 12, 20), dtype=jnp.float32)
    out2 = jax.block_until_ready(tv_loss(IA2, IF2, max_tile_bytes=16 * 1024))
    ref2 = jax.block_until_ready(tv_loss_ref(IA2, IF2))
    assert jnp.allclose(out2, ref2, rtol=1e-5, atol=1e-6), (out2, ref2)

    print("KERNEL_OK")
</pallas_src>

<mosaic_0001>
module attributes {stable_mosaic.version = 11 : i64} {
  func.func @_tv_loss_kernel(%arg0: i32, %arg1: i32, %arg2: memref<128x16xf32, #tpu.memory_space<vmem>>, %arg3: memref<128x16xf32, #tpu.memory_space<vmem>>, %arg4: memref<1x2x16xf32, #tpu.memory_space<vmem>>) attributes {dimension_semantics = [#tpu.dimension_semantics<parallel>, #tpu.dimension_semantics<arbitrary>], iteration_bounds = array<i64: 1, 1>, scalar_prefetch = 0 : i64, scratch_operands = 0 : i64, tpu.core_type = #tpu.core_type<tc>, window_params = [{transform_indices = @transform_0, window_bounds = array<i64: 128, 16>}, {transform_indices = @transform_1, window_bounds = array<i64: 128, 16>}, {transform_indices = @transform_2, window_bounds = array<i64: 1, 2, 16>}]} {
    %c0_i32 = arith.constant 0 : i32
    %0 = arith.cmpi eq, %arg1, %c0_i32 : i32
    %1 = arith.extui %0 : i1 to i32
    %c0_i32_0 = arith.constant 0 : i32
    %2 = arith.cmpi ne, %1, %c0_i32_0 : i32
    scf.if %2 {
      %cst_17 = arith.constant 0.000000e+00 : f32
      %42 = vector.broadcast %cst_17 : f32 to vector<2x16xf32>
      %c0_18 = arith.constant 0 : index
      %c0_19 = arith.constant 0 : index
      %c0_20 = arith.constant 0 : index
      %43 = vector.load %arg4[%c0_18, %c0_19, %c0_20] : memref<1x2x16xf32, #tpu.memory_space<vmem>>, vector<1x2x16xf32>
      %44 = vector.shape_cast %43 : vector<1x2x16xf32> to vector<2x16xf32>
      %45 = vector.shape_cast %42 : vector<2x16xf32> to vector<1x2x16xf32>
      tpu.vector_store %arg4[%c0_18, %c0_19, %c0_20], %45 {strides = array<i32>} : memref<1x2x16xf32, #tpu.memory_space<vmem>>, vector<1x2x16xf32>,
    } else {
    }
    %c0 = arith.constant 0 : index
    %c0_1 = arith.constant 0 : index
    %3 = vector.load %arg2[%c0, %c0_1] : memref<128x16xf32, #tpu.memory_space<vmem>>, vector<128x16xf32>
    %c0_2 = arith.constant 0 : index
    %c0_3 = arith.constant 0 : index
    %4 = vector.load %arg3[%c0_2, %c0_3] : memref<128x16xf32, #tpu.memory_space<vmem>>, vector<128x16xf32>
    %5 = arith.subf %3, %4 : vector<128x16xf32>
    %c1_i32 = arith.constant 1 : i32
    %6 = tpu.dynamic_rotate %5 by %c1_i32 dim 0 : vector<128x16xf32>, i32 -> vector<128x16xf32>
    %7 = arith.subf %5, %6 : vector<128x16xf32>
    %c1_i32_4 = arith.constant 1 : i32
    %8 = tpu.dynamic_rotate %5 by %c1_i32_4 dim 1 : vector<128x16xf32>, i32 -> vector<128x16xf32>
    %9 = arith.subf %5, %8 : vector<128x16xf32>
    %10 = tpu.iota {dimensions = array<i32: 0>} : vector<128x16xi32>
    %11 = tpu.iota {dimensions = array<i32: 1>} : vector<128x16xi32>
    %c15_i32 = arith.constant 15 : i32
    %12 = vector.broadcast %c15_i32 : i32 to vector<128x16xi32>
    %13 = arith.andi %10, %12 : vector<128x16xi32>
    %c0_i32_5 = arith.constant 0 : i32
    %14 = vector.broadcast %c0_i32_5 : i32 to vector<128x16xi32>
    %15 = arith.cmpi ne, %13, %14 : vector<128x16xi32>
    %c0_i32_6 = arith.constant 0 : i32
    %16 = vector.broadcast %c0_i32_6 : i32 to vector<128x16xi32>
    %17 = arith.cmpi sgt, %11, %16 : vector<128x16xi32>
    %cst = arith.constant 0.000000e+00 : f32
    %18 = vector.broadcast %cst : f32 to vector<128x16xf32>
    %19 = arith.select %15, %7, %18 : vector<128x16xi1>, vector<128x16xf32>
    %cst_7 = arith.constant 0.000000e+00 : f32
    %20 = vector.broadcast %cst_7 : f32 to vector<128x16xf32>
    %21 = arith.select %17, %9, %20 : vector<128x16xi1>, vector<128x16xf32>
    %22 = arith.mulf %19, %19 : vector<128x16xf32>
    %cst_8 = arith.constant dense<0.000000e+00> : vector<16xf32>
    %23 = vector.multi_reduction <add>, %22, %cst_8 [0] : vector<128x16xf32> to vector<16xf32>
    %24 = vector.shape_cast %23 : vector<16xf32> to vector<1x16xf32>
    %25 = arith.mulf %21, %21 : vector<128x16xf32>
    %cst_9 = arith.constant dense<0.000000e+00> : vector<16xf32>
    %26 = vector.multi_reduction <add>, %25, %cst_9 [0] : vector<128x16xf32> to vector<16xf32>
    %27 = vector.shape_cast %26 : vector<16xf32> to vector<1x16xf32>
    %28 = tpu.iota {dimensions = array<i32: 0>} : vector<2x16xi32>
    %c0_10 = arith.constant 0 : index
    %c0_11 = arith.constant 0 : index
    %c0_12 = arith.constant 0 : index
    %29 = vector.load %arg4[%c0_10, %c0_11, %c0_12] : memref<1x2x16xf32, #tpu.memory_space<vmem>>, vector<1x2x16xf32>
    %30 = vector.shape_cast %29 : vector<1x2x16xf32> to vector<2x16xf32>
    %c0_i32_13 = arith.constant 0 : i32
    %31 = vector.broadcast %c0_i32_13 : i32 to vector<2x16xi32>
    %32 = arith.cmpi eq, %28, %31 : vector<2x16xi32>
    %33 = vector.shape_cast %24 : vector<1x16xf32> to vector<1x16xf32>
    %34 = vector.broadcast %33 : vector<1x16xf32> to vector<2x16xf32>
    %35 = vector.shape_cast %27 : vector<1x16xf32> to vector<1x16xf32>
    %36 = vector.broadcast %35 : vector<1x16xf32> to vector<2x16xf32>
    %37 = arith.select %32, %34, %36 : vector<2x16xi1>, vector<2x16xf32>
    %38 = arith.addf %30, %37 : vector<2x16xf32>
    %c0_14 = arith.constant 0 : index
    %c0_15 = arith.constant 0 : index
    %c0_16 = arith.constant 0 : index
    %39 = vector.load %arg4[%c0_14, %c0_15, %c0_16] : memref<1x2x16xf32, #tpu.memory_space<vmem>>, vector<1x2x16xf32>
    %40 = vector.shape_cast %39 : vector<1x2x16xf32> to vector<2x16xf32>
    %41 = vector.shape_cast %38 : vector<2x16xf32> to vector<1x2x16xf32>
    tpu.vector_store %arg4[%c0_14, %c0_15, %c0_16], %41 {strides = array<i32>} : memref<1x2x16xf32, #tpu.memory_space<vmem>>, vector<1x2x16xf32>,
    return
  }
  func.func @transform_0(%arg0: i32, %arg1: i32) -> (i32, i32) {
    %c1_i32 = arith.constant 1 : i32
    %0 = arith.muli %arg0, %c1_i32 : i32
    %1 = arith.addi %0, %arg1 : i32
    %c0_i32 = arith.constant 0 : i32
    %2 = arith.minsi %1, %c0_i32 : i32
    %c0_i32_0 = arith.constant 0 : i32
    %c0_i32_1 = arith.constant 0 : i32
    return %2, %c0_i32_0 : i32, i32
  }
  func.func @transform_1(%arg0: i32, %arg1: i32) -> (i32, i32) {
    %c1_i32 = arith.constant 1 : i32
    %0 = arith.muli %arg0, %c1_i32 : i32
    %1 = arith.addi %0, %arg1 : i32
    %c0_i32 = arith.constant 0 : i32
    %2 = arith.minsi %1, %c0_i32 : i32
    %c0_i32_0 = arith.constant 0 : i32
    %c0_i32_1 = arith.constant 0 : i32
    return %2, %c0_i32_0 : i32, i32
  }
  func.func @transform_2(%arg0: i32, %arg1: i32) -> (i32, i32, i32) {
    %c0_i32 = arith.constant 0 : i32
    %c0_i32_0 = arith.constant 0 : i32
    %c0_i32_1 = arith.constant 0 : i32
    return %arg0, %c0_i32, %c0_i32_0 : i32, i32, i32
  }
}

</mosaic_0001>

<llo_original>
// kernel: tv_loss.1
$region0: #{tv_loss.1}
  #allocation0 [shape = 'u32[]', space=smem, size = 0x4, offset = 0x4, fixed_abs, tag = 'smem constant byte address 0x4 - core index']
  #allocation1 [shape = 'u32[144,128]{1,0:T(1,128)}', space=vmem, size = 0x12000, scoped, tag = 'internal scratch']
  %s0 = inlined_call_operand.hbm [shape: f32[128,16], index: 0, kind: input, shape index: {}]
  %s1 = inlined_call_operand.hbm [shape: f32[128,16], index: 1, kind: input, shape index: {}]
  %s2 = inlined_call_operand.vmem [shape: f32[1,2,16], index: 2, kind: output, shape index: {}]
  %s3 = sld [smem:[#allocation0]]
  $region30: #{tv_loss.1} parent=0
    _
  %s5 = ssub.s32 1, %s3
  %s6 = scalar_select 0, %s5, %s3
  $region1: #{tv_loss.1} parent=0
    #allocation2 [shape = 'u8[65536]{0}', space=vmem, size = 0x10000, scoped, tag = 'input window, operand 0, single buffered']
    #allocation3 [shape = 's32[1]{0}', space=sflag, size = 0x4, scoped, tag = 'scoped memory for tv_loss.1']
    #allocation4 [shape = 'u8[65536]{0}', space=vmem, size = 0x10000, scoped, tag = 'input window, operand 1, single buffered']
    #allocation5 [shape = 's32[1]{0}', space=sflag, size = 0x4, scoped, tag = 'scoped memory for tv_loss.1']
    %7 = vsyncpa [#allocation3], 0
    %8 = vsyncpa [#allocation5], 0
    // Predicated region
    $region2: #{tv_loss.1} parent=1 // pred_check
      _
    $region3: #{tv_loss.1} parent=1 // pred_check_branch
      %10 = sbr.rel (0) target = $region5
    $region4: #{tv_loss.1} parent=1 // pred_region
      %s11 = sadd.s32 0, 0
      %p12 = scmp.lt.s32.totalorder %s11, 0
      %s13 = scalar_select %p12, %s11, 0
      %s14 = smul.u32 16, %s13
      %s16 = ssub.s32 2048, 2048
      %17 = vsyncadd [#allocation3], %s16
      %s18 = smul.addr %s14, 128
      %s19 = scalar_lea.hbm %s0, %s18
      %s20 = sshll.u32 [#allocation2], 4
      %s21 = int_to_ptr.vmem [resolvable:$true] %s20
      %26 = dma.hbm_to_vmem [thread:$0]  %s19, 2048, %s21, [#allocation3], 128, 128, 8
    $region5: #{tv_loss.1} parent=1 // pred_fallthru
      _
    // Predicated region
    $region6: #{tv_loss.1} parent=1 // pred_check
      _
    $region7: #{tv_loss.1} parent=1 // pred_check_branch
      %28 = sbr.rel (0) target = $region9
    $region8: #{tv_loss.1} parent=1 // pred_region
      %s29 = sadd.s32 0, 0
      %p30 = scmp.lt.s32.totalorder %s29, 0
      %s31 = scalar_select %p30, %s29, 0
      %s32 = smul.u32 16, %s31
      %s34 = ssub.s32 2048, 2048
      %35 = vsyncadd [#allocation5], %s34
      %s36 = smul.addr %s32, 128
      %s37 = scalar_lea.hbm %s1, %s36
      %s38 = sshll.u32 [#allocation4], 4
      %s39 = int_to_ptr.vmem [resolvable:$true] %s38
      %44 = dma.hbm_to_vmem [thread:$0]  %s37, 2048, %s39, [#allocation5], 128, 128, 8
    $region9: #{tv_loss.1} parent=1 // pred_fallthru
      _
    // Predicated region
    $region10: #{tv_loss.1} parent=1 // pred_check
      _
    $region11: #{tv_loss.1} parent=1 // pred_check_branch
      %46 = sbr.rel (0) target = $region13
    $region12: #{tv_loss.1} parent=1 // pred_region
      %47 = dma.done [#allocation3], 2048
    $region13: #{tv_loss.1} parent=1 // pred_fallthru
      _
    // Predicated region
    $region14: #{tv_loss.1} parent=1 // pred_check
      _
    $region15: #{tv_loss.1} parent=1 // pred_check_branch
      %49 = sbr.rel (0) target = $region17
    $region16: #{tv_loss.1} parent=1 // pred_region
      %50 = dma.done [#allocation5], 2048
    $region17: #{tv_loss.1} parent=1 // pred_fallthru
      _
    %s51 = sadd.s32 0, 0
    %p52 = scmp.lt.s32.totalorder %s51, 0
    %s53 = scalar_select %p52, %s51, 0
    %s54 = smul.u32 16, %s53
    %s55 = sadd.s32 0, 0
    %p56 = scmp.lt.s32.totalorder %s55, 0
    %s57 = scalar_select %p56, %s55, 0
    %s58 = smul.u32 16, %s57
    %p59 = scmp.eq.s32.totalorder 0, 0
    // Predicated region
    $region18: #{tv_loss.1} parent=1 // pred_check
      %p60 = pneg %p59
    $region19: #{tv_loss.1} parent=1 // pred_check_branch
      %62 = sbr.rel (%p60) target = $region21
    $region20: #{tv_loss.1} parent=1 // pred_region
      %vm63 = vcmask 123904
      %64 = vst.msk [vmem:[%s2] sm:$0x3] %vm63, 0.0
    $region21: #{tv_loss.1} parent=1 // pred_fallthru
      _
    %v65 = vld [vmem:[#allocation2] sm:$0xff]
    %v66 = vld [vmem:[#allocation2 + $0x8] sm:$0xff]
    %v67 = vld [vmem:[#allocation2 + $0x10] sm:$0xff]
    %v68 = vld [vmem:[#allocation2 + $0x18] sm:$0xff]
    %v69 = vld [vmem:[#allocation2 + $0x20] sm:$0xff]
    %v70 = vld [vmem:[#allocation2 + $0x28] sm:$0xff]
    %v71 = vld [vmem:[#allocation2 + $0x30] sm:$0xff]
    %v72 = vld [vmem:[#allocation2 + $0x38] sm:$0xff]
    %v73 = vld [vmem:[#allocation2 + $0x40] sm:$0xff]
    %v74 = vld [vmem:[#allocation2 + $0x48] sm:$0xff]
    %v75 = vld [vmem:[#allocation2 + $0x50] sm:$0xff]
    %v76 = vld [vmem:[#allocation2 + $0x58] sm:$0xff]
    %v77 = vld [vmem:[#allocation2 + $0x60] sm:$0xff]
    %v78 = vld [vmem:[#allocation2 + $0x68] sm:$0xff]
    %v79 = vld [vmem:[#allocation2 + $0x70] sm:$0xff]
    %v80 = vld [vmem:[#allocation2 + $0x78] sm:$0xff]
    %v81 = vld [vmem:[#allocation4] sm:$0xff]
    %v82 = vld [vmem:[#allocation4 + $0x8] sm:$0xff]
    %v83 = vld [vmem:[#allocation4 + $0x10] sm:$0xff]
    %v84 = vld [vmem:[#allocation4 + $0x18] sm:$0xff]
    %v85 = vld [vmem:[#allocation4 + $0x20] sm:$0xff]
    %v86 = vld [vmem:[#allocation4 + $0x28] sm:$0xff]
    %v87 = vld [vmem:[#allocation4 + $0x30] sm:$0xff]
    %v88 = vld [vmem:[#allocation4 + $0x38] sm:$0xff]
    %v89 = vld [vmem:[#allocation4 + $0x40] sm:$0xff]
    %v90 = vld [vmem:[#allocation4 + $0x48] sm:$0xff]
    %v91 = vld [vmem:[#allocation4 + $0x50] sm:$0xff]
    %v92 = vld [vmem:[#allocation4 + $0x58] sm:$0xff]
    %v93 = vld [vmem:[#allocation4 + $0x60] sm:$0xff]
    %v94 = vld [vmem:[#allocation4 + $0x68] sm:$0xff]
    %v95 = vld [vmem:[#allocation4 + $0x70] sm:$0xff]
    %v96 = vld [vmem:[#allocation4 + $0x78] sm:$0xff]
    %v97 = vsub.f32 %v65, %v81
    %v98 = vsub.f32 %v66, %v82
    %v99 = vsub.f32 %v67, %v83
    %v100 = vsub.f32 %v68, %v84
    %v101 = vsub.f32 %v69, %v85
    %v102 = vsub.f32 %v70, %v86
    %v103 = vsub.f32 %v71, %v87
    %v104 = vsub.f32 %v72, %v88
    %v105 = vsub.f32 %v73, %v89
    %v106 = vsub.f32 %v74, %v90
    %v107 = vsub.f32 %v75, %v91
    %v108 = vsub.f32 %v76, %v92
    %v109 = vsub.f32 %v77, %v93
    %v110 = vsub.f32 %v78, %v94
    %v111 = vsub.f32 %v79, %v95
    %v112 = vsub.f32 %v80, %v96
    %v113 = vrot.slane %v97, 7
    %v114 = vrot.slane %v98, 7
    %v115 = vrot.slane %v99, 7
    %v116 = vrot.slane %v100, 7
    %v117 = vrot.slane %v101, 7
    %v118 = vrot.slane %v102, 7
    %v119 = vrot.slane %v103, 7
    %v120 = vrot.slane %v104, 7
    %v121 = vrot.slane %v105, 7
    %v122 = vrot.slane %v106, 7
    %v123 = vrot.slane %v107, 7
    %v124 = vrot.slane %v108, 7
    %v125 = vrot.slane %v109, 7
    %v126 = vrot.slane %v110, 7
    %v127 = vrot.slane %v111, 7
    %v128 = vrot.slane %v112, 7
    %v129 = vlaneseq
    %v130 = vshrl.u32 %v129, 7
    %vm131 = vcmp.lt.s32.totalorder %v130, 1
    %v132 = vsel %vm131, %v127, %v128
    %v133 = vsel %vm131, %v126, %v127
    %v134 = vsel %vm131, %v125, %v126
    %v135 = vsel %vm131, %v124, %v125
    %v136 = vsel %vm131, %v123, %v124
    %v137 = vsel %vm131, %v122, %v123
    %v138 = vsel %vm131, %v121, %v122
    %v139 = vsel %vm131, %v120, %v121
    %v140 = vsel %vm131, %v119, %v120
    %v141 = vsel %vm131, %v118, %v119
    %v142 = vsel %vm131, %v117, %v118
    %v143 = vsel %vm131, %v116, %v117
    %v144 = vsel %vm131, %v115, %v116
    %v145 = vsel %vm131, %v114, %v115
    %v146 = vsel %vm131, %v113, %v114
    %v147 = vsel %vm131, %v128, %v113
    %v148 = vsub.f32 %v97, %v147
    %v149 = vsub.f32 %v98, %v146
    %v150 = vsub.f32 %v99, %v145
    %v151 = vsub.f32 %v100, %v144
    %v152 = vsub.f32 %v101, %v143
    %v153 = vsub.f32 %v102, %v142
    %v154 = vsub.f32 %v103, %v141
    %v155 = vsub.f32 %v104, %v140
    %v156 = vsub.f32 %v105, %v139
    %v157 = vsub.f32 %v106, %v138
    %v158 = vsub.f32 %v107, %v137
    %v159 = vsub.f32 %v108, %v136
    %v160 = vsub.f32 %v109, %v135
    %v161 = vsub.f32 %v110, %v134
    %v162 = vsub.f32 %v111, %v133
    %v163 = vsub.f32 %v112, %v132
    %vm164 = vcmask 1047680
    %165 = vrot.lane.b32.xlu0 %v97, 16
    %v166 = vpop.permute.xlu0 %165
    %v167 = vsel %vm164, %v166, %v97
    %168 = vrot.lane.b32.xlu0 %v98, 16
    %v169 = vpop.permute.xlu0 %168
    %v170 = vsel %vm164, %v169, %v98
    %171 = vrot.lane.b32.xlu0 %v99, 16
    %v172 = vpop.permute.xlu0 %171
    %v173 = vsel %vm164, %v172, %v99
    %174 = vrot.lane.b32.xlu0 %v100, 16
    %v175 = vpop.permute.xlu0 %174
    %v176 = vsel %vm164, %v175, %v100
    %177 = vrot.lane.b32.xlu0 %v101, 16
    %v178 = vpop.permute.xlu0 %177
    %v179 = vsel %vm164, %v178, %v101
    %180 = vrot.lane.b32.xlu0 %v102, 16
    %v181 = vpop.permute.xlu0 %180
    %v182 = vsel %vm164, %v181, %v102
    %183 = vrot.lane.b32.xlu0 %v103, 16
    %v184 = vpop.permute.xlu0 %183
    %v185 = vsel %vm164, %v184, %v103
    %186 = vrot.lane.b32.xlu0 %v104, 16
    %v187 = vpop.permute.xlu0 %186
    %v188 = vsel %vm164, %v187, %v104
    %189 = vrot.lane.b32.xlu0 %v105, 16
    %v190 = vpop.permute.xlu0 %189
    %v191 = vsel %vm164, %v190, %v105
    %192 = vrot.lane.b32.xlu0 %v106, 16
    %v193 = vpop.permute.xlu0 %192
    %v194 = vsel %vm164, %v193, %v106
    %195 = vrot.lane.b32.xlu0 %v107, 16
    %v196 = vpop.permute.xlu0 %195
    %v197 = vsel %vm164, %v196, %v107
    %198 = vrot.lane.b32.xlu0 %v108, 16
    %v199 = vpop.permute.xlu0 %198
    %v200 = vsel %vm164, %v199, %v108
    %201 = vrot.lane.b32.xlu0 %v109, 16
    %v202 = vpop.permute.xlu0 %201
    %v203 = vsel %vm164, %v202, %v109
    %204 = vrot.lane.b32.xlu0 %v110, 16
    %v205 = vpop.permute.xlu0 %204
    %v206 = vsel %vm164, %v205, %v110
    %207 = vrot.lane.b32.xlu0 %v111, 16
    %v208 = vpop.permute.xlu0 %207
    %v209 = vsel %vm164, %v208, %v111
    %210 = vrot.lane.b32.xlu0 %v112, 16
    %v211 = vpop.permute.xlu0 %210
    %v212 = vsel %vm164, %v211, %v112
    %213 = vrot.lane.b32.xlu0 %v167, 16
    %v214 = vpop.permute.xlu0 %213
    %215 = vrot.lane.b32.xlu0 %v170, 16
    %v216 = vpop.permute.xlu0 %215
    %217 = vrot.lane.b32.xlu0 %v173, 16
    %v218 = vpop.permute.xlu0 %217
    %219 = vrot.lane.b32.xlu0 %v176, 16
    %v220 = vpop.permute.xlu0 %219
    %221 = vrot.lane.b32.xlu0 %v179, 16
    %v222 = vpop.permute.xlu0 %221
    %223 = vrot.lane.b32.xlu0 %v182, 16
    %v224 = vpop.permute.xlu0 %223
    %225 = vrot.lane.b32.xlu0 %v185, 16
    %v226 = vpop.permute.xlu0 %225
    %227 = vrot.lane.b32.xlu0 %v188, 16
    %v228 = vpop.permute.xlu0 %227
    %229 = vrot.lane.b32.xlu0 %v191, 16
    %v230 = vpop.permute.xlu0 %229
    %231 = vrot.lane.b32.xlu0 %v194, 16
    %v232 = vpop.permute.xlu0 %231
    %233 = vrot.lane.b32.xlu0 %v197, 16
    %v234 = vpop.permute.xlu0 %233
    %235 = vrot.lane.b32.xlu0 %v200, 16
    %v236 = vpop.permute.xlu0 %235
    %237 = vrot.lane.b32.xlu0 %v203, 16
    %v238 = vpop.permute.xlu0 %237
    %239 = vrot.lane.b32.xlu0 %v206, 16
    %v240 = vpop.permute.xlu0 %239
    %241 = vrot.lane.b32.xlu0 %v209, 16
    %v242 = vpop.permute.xlu0 %241
    %243 = vrot.lane.b32.xlu0 %v212, 16
    %v244 = vpop.permute.xlu0 %243
    %v245 = vsel %vm164, %v214, %v97
    %v246 = vsel %vm164, %v216, %v98
    %v247 = vsel %vm164, %v218, %v99
    %v248 = vsel %vm164, %v220, %v100
    %v249 = vsel %vm164, %v222, %v101
    %v250 = vsel %vm164, %v224, %v102
    %v251 = vsel %vm164, %v226, %v103
    %v252 = vsel %vm164, %v228, %v104
    %v253 = vsel %vm164, %v230, %v105
    %v254 = vsel %vm164, %v232, %v106
    %v255 = vsel %vm164, %v234, %v107
    %v256 = vsel %vm164, %v236, %v108
    %v257 = vsel %vm164, %v238, %v109
    %v258 = vsel %vm164, %v240, %v110
    %v259 = vsel %vm164, %v242, %v111
    %v260 = vsel %vm164, %v244, %v112
    %277 = vrot.lane.b32.xlu0 %v245, 113
    %v278 = vpop.permute.xlu0 %277
    %279 = vrot.lane.b32.xlu0 %v246, 113
    %v280 = vpop.permute.xlu0 %279
    %281 = vrot.lane.b32.xlu0 %v247, 113
    %v282 = vpop.permute.xlu0 %281
    %283 = vrot.lane.b32.xlu0 %v248, 113
    %v284 = vpop.permute.xlu0 %283
    %285 = vrot.lane.b32.xlu0 %v249, 113
    %v286 = vpop.permute.xlu0 %285
    %287 = vrot.lane.b32.xlu0 %v250, 113
    %v288 = vpop.permute.xlu0 %287
    %289 = vrot.lane.b32.xlu0 %v251, 113
    %v290 = vpop.permute.xlu0 %289
    %291 = vrot.lane.b32.xlu0 %v252, 113
    %v292 = vpop.permute.xlu0 %291
    %293 = vrot.lane.b32.xlu0 %v253, 113
    %v294 = vpop.permute.xlu0 %293
    %295 = vrot.lane.b32.xlu0 %v254, 113
    %v296 = vpop.permute.xlu0 %295
    %297 = vrot.lane.b32.xlu0 %v255, 113
    %v298 = vpop.permute.xlu0 %297
    %299 = vrot.lane.b32.xlu0 %v256, 113
    %v300 = vpop.permute.xlu0 %299
    %301 = vrot.lane.b32.xlu0 %v257, 113
    %v302 = vpop.permute.xlu0 %301
    %303 = vrot.lane.b32.xlu0 %v258, 113
    %v304 = vpop.permute.xlu0 %303
    %305 = vrot.lane.b32.xlu0 %v259, 113
    %v306 = vpop.permute.xlu0 %305
    %307 = vrot.lane.b32.xlu0 %v260, 113
    %v308 = vpop.permute.xlu0 %307
    %v325 = vsub.f32 %v97, %v278
    %v326 = vsub.f32 %v98, %v280
    %v327 = vsub.f32 %v99, %v282
    %v328 = vsub.f32 %v100, %v284
    %v329 = vsub.f32 %v101, %v286
    %v330 = vsub.f32 %v102, %v288
    %v331 = vsub.f32 %v103, %v290
    %v332 = vsub.f32 %v104, %v292
    %v333 = vsub.f32 %v105, %v294
    %v334 = vsub.f32 %v106, %v296
    %v335 = vsub.f32 %v107, %v298
    %v336 = vsub.f32 %v108, %v300
    %v337 = vsub.f32 %v109, %v302
    %v338 = vsub.f32 %v110, %v304
    %v339 = vsub.f32 %v111, %v306
    %v340 = vsub.f32 %v112, %v308
    %v341 = vadd.s32 %v130, 8
    %v342 = vadd.s32 %v130, 16
    %v343 = vadd.s32 %v130, 24
    %v344 = vadd.s32 %v130, 32
    %v345 = vadd.s32 %v130, 40
    %v346 = vadd.s32 %v130, 48
    %v347 = vadd.s32 %v130, 56
    %v348 = vadd.s32 %v130, 64
    %v349 = vadd.s32 %v130, 72
    %v350 = vadd.s32 %v130, 80
    %v351 = vadd.s32 %v130, 88
    %v352 = vadd.s32 %v130, 96
    %v353 = vadd.s32 %v130, 104
    %v354 = vadd.s32 %v130, 112
    %v355 = vadd.s32 %v130, 120
    %v356 = vlaneseq
    %v357 = vand.u32 %v356, 127
    %v358 = vand.u32 %v130, 15
    %v359 = vand.u32 %v341, 15
    %v360 = vand.u32 %v342, 15
    %v361 = vand.u32 %v343, 15
    %v362 = vand.u32 %v344, 15
    %v363 = vand.u32 %v345, 15
    %v364 = vand.u32 %v346, 15
    %v365 = vand.u32 %v347, 15
    %v366 = vand.u32 %v348, 15
    %v367 = vand.u32 %v349, 15
    %v368 = vand.u32 %v350, 15
    %v369 = vand.u32 %v351, 15
    %v370 = vand.u32 %v352, 15
    %v371 = vand.u32 %v353, 15
    %v372 = vand.u32 %v354, 15
    %v373 = vand.u32 %v355, 15
    %vm374 = vcmp.ne.s32.totalorder %v358, 0
    %vm375 = vcmp.ne.s32.totalorder %v359, 0
    %vm376 = vcmp.ne.s32.totalorder %v360, 0
    %vm377 = vcmp.ne.s32.totalorder %v361, 0
    %vm378 = vcmp.ne.s32.totalorder %v362, 0
    %vm379 = vcmp.ne.s32.totalorder %v363, 0
    %vm380 = vcmp.ne.s32.totalorder %v364, 0
    %vm381 = vcmp.ne.s32.totalorder %v365, 0
    %vm382 = vcmp.ne.s32.totalorder %v366, 0
    %vm383 = vcmp.ne.s32.totalorder %v367, 0
    %vm384 = vcmp.ne.s32.totalorder %v368, 0
    %vm385 = vcmp.ne.s32.totalorder %v369, 0
    %vm386 = vcmp.ne.s32.totalorder %v370, 0
    %vm387 = vcmp.ne.s32.totalorder %v371, 0
    %vm388 = vcmp.ne.s32.totalorder %v372, 0
    %vm389 = vcmp.ne.s32.totalorder %v373, 0
    %vm390 = vcmp.gt.s32.totalorder %v357, 0
    %v391 = vsel %vm374, %v148, 0.0
    %v392 = vsel %vm375, %v149, 0.0
    %v393 = vsel %vm376, %v150, 0.0
    %v394 = vsel %vm377, %v151, 0.0
    %v395 = vsel %vm378, %v152, 0.0
    %v396 = vsel %vm379, %v153, 0.0
    %v397 = vsel %vm380, %v154, 0.0
    %v398 = vsel %vm381, %v155, 0.0
    %v399 = vsel %vm382, %v156, 0.0
    %v400 = vsel %vm383, %v157, 0.0
    %v401 = vsel %vm384, %v158, 0.0
    %v402 = vsel %vm385, %v159, 0.0
    %v403 = vsel %vm386, %v160, 0.0
    %v404 = vsel %vm387, %v161, 0.0
    %v405 = vsel %vm388, %v162, 0.0
    %v406 = vsel %vm389, %v163, 0.0
    %v407 = vsel %vm390, %v325, 0.0
    %v408 = vsel %vm390, %v326, 0.0
    %v409 = vsel %vm390, %v327, 0.0
    %v410 = vsel %vm390, %v328, 0.0
    %v411 = vsel %vm390, %v329, 0.0
    %v412 = vsel %vm390, %v330, 0.0
    %v413 = vsel %vm390, %v331, 0.0
    %v414 = vsel %vm390, %v332, 0.0
    %v415 = vsel %vm390, %v333, 0.0
    %v416 = vsel %vm390, %v334, 0.0
    %v417 = vsel %vm390, %v335, 0.0
    %v418 = vsel %vm390, %v336, 0.0
    %v419 = vsel %vm390, %v337, 0.0
    %v420 = vsel %vm390, %v338, 0.0
    %v421 = vsel %vm390, %v339, 0.0
    %v422 = vsel %vm390, %v340, 0.0
    %v423 = vmul.f32 %v391, %v391
    %v424 = vmul.f32 %v392, %v392
    %v425 = vmul.f32 %v393, %v393
    %v426 = vmul.f32 %v394, %v394
    %v427 = vmul.f32 %v395, %v395
    %v428 = vmul.f32 %v396, %v396
    %v429 = vmul.f32 %v397, %v397
    %v430 = vmul.f32 %v398, %v398
    %v431 = vmul.f32 %v399, %v399
    %v432 = vmul.f32 %v400, %v400
    %v433 = vmul.f32 %v401, %v401
    %v434 = vmul.f32 %v402, %v402
    %v435 = vmul.f32 %v403, %v403
    %v436 = vmul.f32 %v404, %v404
    %v437 = vmul.f32 %v405, %v405
    %v438 = vmul.f32 %v406, %v406
    %vm439 = vcmask 130048
    %v440 = vsel %vm439, %v423, 0.0
    %v441 = vsel %vm439, %v424, 0.0
    %v442 = vadd.f32 %v440, %v441
    %v443 = vsel %vm439, %v425, 0.0
    %v444 = vadd.f32 %v442, %v443
    %v445 = vsel %vm439, %v426, 0.0
    %v446 = vadd.f32 %v444, %v445
    %v447 = vsel %vm439, %v427, 0.0
    %v448 = vadd.f32 %v446, %v447
    %v449 = vsel %vm439, %v428, 0.0
    %v450 = vadd.f32 %v448, %v449
    %v451 = vsel %vm439, %v429, 0.0
    %v452 = vadd.f32 %v450, %v451
    %v453 = vsel %vm439, %v430, 0.0
    %v454 = vadd.f32 %v452, %v453
    %v455 = vsel %vm439, %v431, 0.0
    %v456 = vadd.f32 %v454, %v455
    %v457 = vsel %vm439, %v432, 0.0
    %v458 = vadd.f32 %v456, %v457
    %v459 = vsel %vm439, %v433, 0.0
    %v460 = vadd.f32 %v458, %v459
    %v461 = vsel %vm439, %v434, 0.0
    %v462 = vadd.f32 %v460, %v461
    %v463 = vsel %vm439, %v435, 0.0
    %v464 = vadd.f32 %v462, %v463
    %v465 = vsel %vm439, %v436, 0.0
    %v466 = vadd.f32 %v464, %v465
    %v467 = vsel %vm439, %v437, 0.0
    %v468 = vadd.f32 %v466, %v467
    %v469 = vsel %vm439, %v438, 0.0
    %v470 = vadd.f32 %v468, %v469
    %v471 = vrot.slane %v470, 4
    %v472 = vadd.f32 %v470, %v471
    %v473 = vrot.slane %v472, 2
    %v474 = vadd.f32 %v472, %v473
    %v475 = vrot.slane %v474, 1
    %v476 = vadd.f32 %v474, %v475
    %v477 = vmul.f32 %v407, %v407
    %v478 = vmul.f32 %v408, %v408
    %v479 = vmul.f32 %v409, %v409
    %v480 = vmul.f32 %v410, %v410
    %v481 = vmul.f32 %v411, %v411
    %v482 = vmul.f32 %v412, %v412
    %v483 = vmul.f32 %v413, %v413
    %v484 = vmul.f32 %v414, %v414
    %v485 = vmul.f32 %v415, %v415
    %v486 = vmul.f32 %v416, %v416
    %v487 = vmul.f32 %v417, %v417
    %v488 = vmul.f32 %v418, %v418
    %v489 = vmul.f32 %v419, %v419
    %v490 = vmul.f32 %v420, %v420
    %v491 = vmul.f32 %v421, %v421
    %v492 = vmul.f32 %v422, %v422
    %v493 = vsel %vm439, %v477, 0.0
    %v494 = vsel %vm439, %v478, 0.0
    %v495 = vadd.f32 %v493, %v494
    %v496 = vsel %vm439, %v479, 0.0
    %v497 = vadd.f32 %v495, %v496
    %v498 = vsel %vm439, %v480, 0.0
    %v499 = vadd.f32 %v497, %v498
    %v500 = vsel %vm439, %v481, 0.0
    %v501 = vadd.f32 %v499, %v500
    %v502 = vsel %vm439, %v482, 0.0
    %v503 = vadd.f32 %v501, %v502
    %v504 = vsel %vm439, %v483, 0.0
    %v505 = vadd.f32 %v503, %v504
    %v506 = vsel %vm439, %v484, 0.0
    %v507 = vadd.f32 %v505, %v506
    %v508 = vsel %vm439, %v485, 0.0
    %v509 = vadd.f32 %v507, %v508
    %v510 = vsel %vm439, %v486, 0.0
    %v511 = vadd.f32 %v509, %v510
    %v512 = vsel %vm439, %v487, 0.0
    %v513 = vadd.f32 %v511, %v512
    %v514 = vsel %vm439, %v488, 0.0
    %v515 = vadd.f32 %v513, %v514
    %v516 = vsel %vm439, %v489, 0.0
    %v517 = vadd.f32 %v515, %v516
    %v518 = vsel %vm439, %v490, 0.0
    %v519 = vadd.f32 %v517, %v518
    %v520 = vsel %vm439, %v491, 0.0
    %v521 = vadd.f32 %v519, %v520
    %v522 = vsel %vm439, %v492, 0.0
    %v523 = vadd.f32 %v521, %v522
    %v524 = vrot.slane %v523, 4
    %v525 = vadd.f32 %v523, %v524
    %v526 = vrot.slane %v525, 2
    %v527 = vadd.f32 %v525, %v526
    %v528 = vrot.slane %v527, 1
    %v529 = vadd.f32 %v527, %v528
    %v530 = vld [vmem:[%s2] sm:$0x3]
    %vm531 = vcmp.eq.s32.totalorder %v130, 0
    %v532 = vsel %vm531, %v476, %v529
    %v533 = vadd.f32 %v530, %v532
    %vm534 = vcmask 123904
    %535 = vst.msk [vmem:[%s2] sm:$0x3] %vm534, %v533
    // Predicated region
    $region22: #{tv_loss.1} parent=1 // pred_check
      _
    $region23: #{tv_loss.1} parent=1 // pred_check_branch
      %537 = sbr.rel (0) target = $region25
    $region24: #{tv_loss.1} parent=1 // pred_region
      _
    $region25: #{tv_loss.1} parent=1 // pred_fallthru
      _
    // Predicated region
    $region26: #{tv_loss.1} parent=1 // pred_check
      _
    $region27: #{tv_loss.1} parent=1 // pred_check_branch
      %539 = sbr.rel (0) target = $region29
    $region28: #{tv_loss.1} parent=1 // pred_region
      _
    $region29: #{tv_loss.1} parent=1 // pred_fallthru
      _
    %540 = vsyncpa [#allocation3], 1
    %541 = vsyncpa [#allocation5], 1

</llo_original>
